<compile_context>
chip_gen: v5e
topology: v5e:2x2
jax: 0.10.0
libtpu: 0.0.40
codegen_flags: <defaults>
</compile_context>

<pallas_src>
import functools

import jax
import jax.numpy as jnp
from jax.experimental import pallas as pl
from jax.experimental.pallas import tpu as pltpu

IGNORE_INDEX = -100
_LANE = 128
_ABS_MAX_TILE_M = 1 << 16       # sanity cap on rows per grid step
_ONEHOT_MATMUL_MAX_C = 128      # class-count threshold for the small-C path


def _round_up(x, m):
    return ((x + m - 1) // m) * m


def _vmem_budgets():
    """(vmem_limit_bytes, pipeline_budget_bytes) sized for the local TPU generation."""
    cap = None
    try:
        cap = getattr(pltpu.get_tpu_info(), "vmem_capacity_bytes", None)
    except Exception:
        cap = None
    if cap is None:
        cap = 64 * 1024 * 1024                     # conservative: assume v7x-sized VMEM
    if cap >= 96 * 1024 * 1024:                    # v5e / v6e: 128 MiB physical VMEM
        limit, budget = 96 * 1024 * 1024, 72 * 1024 * 1024
    else:                                          # v7x: 64 MiB physical VMEM
        limit, budget = 48 * 1024 * 1024, 32 * 1024 * 1024
    limit = min(limit, int(cap) * 3 // 4)          # never exceed 3/4 of physical VMEM
    budget = min(budget, limit - 8 * 1024 * 1024)
    return limit, budget


def _choose_tile_m(n_rows, n_classes, itemsize, pipeline_budget, onehot_path,
                   max_tile_m):
    """Largest sublane-aligned row tile whose *real* VMEM footprint fits the budget."""
    lane_c = _round_up(n_classes, _LANE)           # (tile_m, C) buffers pad C to 128 lanes
    sub = {1: 32, 2: 16}.get(itemsize, 8)          # sublane packing of the input dtype
    bytes_per_row = (
        2 * lane_c * itemsize                      # double-buffered logits block
        + 3 * lane_c * 4                           # in-kernel f32 full-tile temps / spills
    )
    if onehot_path:
        # dense (1, 1, tile_m) int32 target block (8-sublane pad) + one-hot^T rows
        bytes_per_row += 2 * 8 * 4 + _round_up(n_classes, 8) * 4
    else:
        # lane-sparse (tile_m, 1) int32 target block pads to 128 lanes per row
        bytes_per_row += 2 * _LANE * 4
    tile = pipeline_budget // max(bytes_per_row, 1)
    tile = min(tile, _ABS_MAX_TILE_M, _round_up(n_rows, sub))
    if n_rows > sub:                               # keep >= 2 blocks: both v7x TCs get work
        tile = min(tile, _round_up(-(-n_rows // 2), sub))
    if max_tile_m is not None:
        tile = min(tile, max_tile_m)
    tile = max(sub, (tile // sub) * sub)
    return int(tile)


def _ce_kernel_onehot(logits_ref, tgt_ref, out_ref, *, ignore_index, n_classes,
                      n_rows, tile_m, ragged):
    """Small-C path: one (tile_m, C) row tile -> scalar partial NLL sum.

    logits_ref: (tile_m, C) float  (tail tile may read stale/OOB rows)
    tgt_ref:    (1, 1, tile_m) int32, lane-dense (padded with ignore_index)
    out_ref:    (8, 128) f32 per-block partial-sum slab (lane dense)
    """
    i = pl.program_id(0)
    x = logits_ref[...]                                        # (TM, C), native dtype
    t_row = tgt_ref[0]                                         # (1, TM) int32

    if ragged:
        # The last tile reads past the end of the logits array: zero the stale
        # rows with a select (never multiply-by-mask) so NaN/Inf garbage cannot
        # leak through the matmul below.  Their targets are padded to
        # ignore_index, so they contribute nothing either way.
        row_ids = i * tile_m + jax.lax.broadcasted_iota(jnp.int32, (tile_m, 1), 0)
        x = jnp.where(row_ids < n_rows, x, jnp.zeros_like(x))

    # numerically-stable log-sum-exp over the class (lane) axis; heavy temps in
    # f32 only (no eager full-tile cast of x).
    m = jnp.max(x, axis=-1, keepdims=True)
    e = jnp.exp(x.astype(jnp.float32) - m.astype(jnp.float32))
    lse = jnp.log(jnp.sum(e, axis=-1, keepdims=True)) + m.astype(jnp.float32)
    nll = lse - x.astype(jnp.float32)                          # (TM, C) = -log_softmax

    # one-hot^T built entirely in the lane-dense target layout: class iota on
    # sublanes, targets broadcast along sublanes -> no lane->sublane relayout.
    # Ignored / padded / out-of-range targets give an all-zero column.
    t_row = jnp.where(t_row == ignore_index, -1, t_row)
    c_rows = _round_up(n_classes, 8)
    cls = jax.lax.broadcasted_iota(jnp.int32, (c_rows, tile_m), 0)
    onehot_t = (cls == t_row).astype(jnp.float32)              # (c_rows, TM)

    # sum over valid rows of nll[r, t[r]] == trace(onehot^T @ nll); the MXU
    # bridges the lane-dense target layout and the sublane-dense row layout.
    prod = jnp.dot(onehot_t, nll, preferred_element_type=jnp.float32)  # (c_rows, C)
    cc = jax.lax.broadcasted_iota(jnp.int32, (c_rows, n_classes), 0)
    rr = jax.lax.broadcasted_iota(jnp.int32, (c_rows, n_classes), 1)
    partial = jnp.sum(jnp.where(cc == rr, prod, 0.0))

    out_ref[...] = jnp.broadcast_to(partial, out_ref.shape)


def _ce_kernel_gather(logits_ref, tgt_ref, out_ref, *, ignore_index):
    """Large-C path: targets as a (tile_m, 1) column, one-hot select per row.

    logits_ref: (tile_m, C) float   tgt_ref: (tile_m, 1) int32 (padded w/ ignore)
    """
    x = logits_ref[...]                                        # (TM, C)
    t = tgt_ref[...]                                           # (TM, 1)
    valid = t != ignore_index

    m = jnp.max(x, axis=-1, keepdims=True)
    e = jnp.exp(x.astype(jnp.float32) - m.astype(jnp.float32))
    lse = jnp.log(jnp.sum(e, axis=-1, keepdims=True)) + m.astype(jnp.float32)

    cls = jax.lax.broadcasted_iota(jnp.int32, x.shape, 1)
    tgt_logit = jnp.sum(
        jnp.where(cls == t, x, jnp.zeros_like(x)).astype(jnp.float32),
        axis=-1, keepdims=True)
    per_tok = jnp.where(valid, lse - tgt_logit, 0.0)           # select: NaN-safe masking
    out_ref[...] = jnp.broadcast_to(jnp.sum(per_tok), out_ref.shape)


def cross_entropy_loss(pred, target, *, ignore_index=IGNORE_INDEX,
                       max_tile_m=None, onehot_matmul_max_c=_ONEHOT_MATMUL_MAX_C):
    """pred: (B, L, C) float, target: (B, L) int -> scalar f32 (mean over valid)."""
    B, L, C = pred.shape
    N = B * L
    logits = pred.reshape(N, C)
    itemsize = jnp.dtype(logits.dtype).itemsize

    vmem_limit, pipeline_budget = _vmem_budgets()
    onehot_path = C <= onehot_matmul_max_c
    tile_m = _choose_tile_m(N, C, itemsize, pipeline_budget, onehot_path, max_tile_m)
    n_blocks = -(-N // tile_m)
    n_pad = n_blocks * tile_m
    ragged = (N % tile_m) != 0

    # Targets are tiny: pad to the full grid extent with ignore_index and ship
    # lane-dense (small-C path) or column-major (large-C path).  The big logits
    # array is never copied; the ragged tail is masked in-kernel.
    tgt_flat = jnp.pad(target.reshape(-1).astype(jnp.int32), (0, n_pad - N),
                       constant_values=ignore_index)

    if onehot_path:
        tgt_in = tgt_flat.reshape(n_blocks, 1, tile_m)
        tgt_spec = pl.BlockSpec((1, 1, tile_m), lambda i: (i, 0, 0))
        kernel = functools.partial(
            _ce_kernel_onehot, ignore_index=ignore_index, n_classes=C,
            n_rows=N, tile_m=tile_m, ragged=ragged)
    else:
        tgt_in = tgt_flat.reshape(n_pad, 1)
        tgt_spec = pl.BlockSpec((tile_m, 1), lambda i: (i, 0))
        kernel = functools.partial(_ce_kernel_gather, ignore_index=ignore_index)

    cost = pl.CostEstimate(
        flops=int(6 * N * C),
        transcendentals=int(N * C + N),
        bytes_accessed=int(N * C * itemsize + n_pad * 4 + n_blocks * 8 * 128 * 4))

    partials = pl.pallas_call(
        kernel,
        out_shape=jax.ShapeDtypeStruct((n_blocks * 8, 128), jnp.float32),
        grid_spec=pltpu.PrefetchScalarGridSpec(
            num_scalar_prefetch=0,
            grid=(n_blocks,),
            in_specs=[
                pl.BlockSpec((tile_m, C), lambda i: (i, 0)),
                tgt_spec,
            ],
            out_specs=pl.BlockSpec((8, 128), lambda i: (i, 0)),
        ),
        compiler_params=pltpu.CompilerParams(
            dimension_semantics=("parallel",),
            vmem_limit_bytes=vmem_limit),
        cost_estimate=cost,
    )(logits, tgt_in)

    # one representative element per block -> exact sum of per-block partials
    loss_sum = jnp.sum(partials.reshape(n_blocks, 8, 128)[:, 0, 0])
    # valid-token count in integer arithmetic (exact), converted once for the divide
    count = jnp.sum((target.reshape(-1) != ignore_index).astype(jnp.int32))
    return (loss_sum / count.astype(jnp.float32)).astype(jnp.float32)


def _reference(pred, target, ignore_index=IGNORE_INDEX):
    """Pure-JAX reference matching torch.nn.CrossEntropyLoss(ignore_index=-100)."""
    B, L, C = pred.shape
    x = pred.reshape(-1, C).astype(jnp.float32)
    t = target.reshape(-1)
    logp = jax.nn.log_softmax(x, axis=-1)
    valid = t != ignore_index
    t_safe = jnp.where(valid, t, 0)
    nll = -jnp.take_along_axis(logp, t_safe[:, None], axis=-1)[:, 0]
    nll = jnp.where(valid, nll, 0.0)
    return jnp.sum(nll) / jnp.sum(valid.astype(jnp.float32))


if __name__ == "__main__":
    key = jax.random.PRNGKey(0)
    ks = jax.random.split(key, 9)

    # Test 1: module-like shapes (B, L, C); small-C (one-hot / MXU) path, 2 blocks.
    B, L, C = 2, 16, 5
    pred = jax.random.normal(ks[0], (B, L, C), dtype=jnp.float32)
    target = jax.random.randint(ks[1], (B, L), 0, C, dtype=jnp.int32)
    target = jnp.where(jax.random.bernoulli(ks[2], 0.2, (B, L)), IGNORE_INDEX, target)
    loss = jax.block_until_ready(cross_entropy_loss(pred, target))
    ref = jax.block_until_ready(_reference(pred, target))
    assert jnp.allclose(loss, ref, atol=1e-5, rtol=1e-5), (loss, ref)

    # Test 2: multi-block grid with a ragged tail tile (in-kernel stale-row masking).
    B2, L2, C2 = 3, 50, 7            # N = 150, forced tile_m = 64 -> 3 blocks
    pred2 = jax.random.normal(ks[3], (B2, L2, C2), dtype=jnp.float32)
    target2 = jax.random.randint(ks[4], (B2, L2), 0, C2, dtype=jnp.int32)
    target2 = jnp.where(jax.random.bernoulli(ks[5], 0.25, (B2, L2)),
                        IGNORE_INDEX, target2)
    loss2 = jax.block_until_ready(cross_entropy_loss(pred2, target2, max_tile_m=64))
    ref2 = jax.block_until_ready(_reference(pred2, target2))
    assert jnp.allclose(loss2, ref2, atol=1e-5, rtol=1e-5), (loss2, ref2)

    # Test 3: force the large-C (column-target) path on the same data.
    loss3 = jax.block_until_ready(
        cross_entropy_loss(pred2, target2, max_tile_m=64, onehot_matmul_max_c=0))
    assert jnp.allclose(loss3, ref2, atol=1e-5, rtol=1e-5), (loss3, ref2)

    # Test 4: bf16 logits (16-row sublane packing) on the small-C path, ragged tail.
    B4, L4, C4 = 2, 24, 5
    pred4 = jax.random.normal(ks[6], (B4, L4, C4), dtype=jnp.float32).astype(jnp.bfloat16)
    target4 = jax.random.randint(ks[7], (B4, L4), 0, C4, dtype=jnp.int32)
    target4 = jnp.where(jax.random.bernoulli(ks[8], 0.2, (B4, L4)),
                        IGNORE_INDEX, target4)
    loss4 = jax.block_until_ready(cross_entropy_loss(pred4, target4, max_tile_m=32))
    ref4 = jax.block_until_ready(_reference(pred4, target4))
    assert jnp.allclose(loss4, ref4, atol=2e-2, rtol=2e-2), (loss4, ref4)

    print("KERNEL_OK")
</pallas_src>

<mosaic_0001>
module attributes {stable_mosaic.version = 11 : i64} {
  func.func @_ce_kernel_onehot(%arg0: i32, %arg1: memref<16x5xf32, #tpu.memory_space<vmem>>, %arg2: memref<1x1x16xi32, #tpu.memory_space<vmem>>, %arg3: memref<8x128xf32, #tpu.memory_space<vmem>>) attributes {dimension_semantics = [#tpu.dimension_semantics<parallel>], iteration_bounds = array<i64: 2>, scalar_prefetch = 0 : i64, scratch_operands = 0 : i64, tpu.core_type = #tpu.core_type<tc>, window_params = [{transform_indices = @transform_0, window_bounds = array<i64: 16, 5>}, {transform_indices = @transform_1, window_bounds = array<i64: 1, 1, 16>}, {transform_indices = @transform_2, window_bounds = array<i64: 8, 128>}]} {
    %c0 = arith.constant 0 : index
    %c0_0 = arith.constant 0 : index
    %0 = vector.load %arg1[%c0, %c0_0] : memref<16x5xf32, #tpu.memory_space<vmem>>, vector<16x5xf32>
    %c0_1 = arith.constant 0 : index
    %c0_2 = arith.constant 0 : index
    %c0_3 = arith.constant 0 : index
    %1 = vector.load %arg2[%c0_1, %c0_2, %c0_3] : memref<1x1x16xi32, #tpu.memory_space<vmem>>, vector<1x1x16xi32>
    %2 = vector.shape_cast %1 : vector<1x1x16xi32> to vector<1x16xi32>
    %cst = arith.constant dense<0xFF800000> : vector<16xf32>
    %3 = vector.multi_reduction <maximumf>, %0, %cst [1] : vector<16x5xf32> to vector<16xf32>
    %4 = vector.shape_cast %3 : vector<16xf32> to vector<16x1xf32>
    %5 = vector.broadcast %4 : vector<16x1xf32> to vector<16x5xf32>
    %6 = arith.subf %0, %5 : vector<16x5xf32>
    %7 = math.exp %6 : vector<16x5xf32>
    %cst_4 = arith.constant dense<0.000000e+00> : vector<16xf32>
    %8 = vector.multi_reduction <add>, %7, %cst_4 [1] : vector<16x5xf32> to vector<16xf32>
    %9 = vector.shape_cast %8 : vector<16xf32> to vector<16x1xf32>
    %10 = math.log %9 : vector<16x1xf32>
    %11 = arith.addf %10, %4 : vector<16x1xf32>
    %12 = vector.broadcast %11 : vector<16x1xf32> to vector<16x5xf32>
    %13 = arith.subf %12, %0 : vector<16x5xf32>
    %c-100_i32 = arith.constant -100 : i32
    %14 = vector.broadcast %c-100_i32 : i32 to vector<1x16xi32>
    %15 = arith.cmpi eq, %2, %14 : vector<1x16xi32>
    %c-1_i32 = arith.constant -1 : i32
    %16 = vector.broadcast %c-1_i32 : i32 to vector<1x16xi32>
    %17 = arith.select %15, %16, %2 : vector<1x16xi1>, vector<1x16xi32>
    %18 = tpu.iota {dimensions = array<i32: 0>} : vector<8x16xi32>
    %19 = vector.broadcast %17 : vector<1x16xi32> to vector<8x16xi32>
    %20 = arith.cmpi eq, %18, %19 : vector<8x16xi32>
    %21 = arith.extui %20 : vector<8x16xi1> to vector<8x16xi32>
    %22 = arith.sitofp %21 : vector<8x16xi32> to vector<8x16xf32>
    %cst_5 = arith.constant dense<0.000000e+00> : vector<8x5xf32>
    %23 = tpu.matmul %22, %13, %cst_5 {dimension_numbers = #tpu.dot_dimension_numbers<[1], [0], [0], [1], [0, 0, 1, 1], [], []>} : vector<8x16xf32>, vector<16x5xf32>, vector<8x5xf32> -> vector<8x5xf32>
    %24 = tpu.iota {dimensions = array<i32: 0>} : vector<8x5xi32>
    %25 = tpu.iota {dimensions = array<i32: 1>} : vector<8x5xi32>
    %26 = arith.cmpi eq, %24, %25 : vector<8x5xi32>
    %cst_6 = arith.constant 0.000000e+00 : f32
    %27 = vector.broadcast %cst_6 : f32 to vector<8x5xf32>
    %28 = arith.select %26, %23, %27 : vector<8x5xi1>, vector<8x5xf32>
    %29 = vector.shape_cast %28 : vector<8x5xf32> to vector<1x8x5xf32>
    %cst_7 = arith.constant dense<0.000000e+00> : vector<1xf32>
    %30 = vector.multi_reduction <add>, %29, %cst_7 [1, 2] : vector<1x8x5xf32> to vector<1xf32>
    %31 = vector.shape_cast %30 : vector<1xf32> to vector<1x1x1xf32>
    %32 = vector.extract %31[0, 0, 0] : f32 from vector<1x1x1xf32>
    %33 = vector.broadcast %32 : f32 to vector<8x128xf32>
    %c0_8 = arith.constant 0 : index
    %c0_9 = arith.constant 0 : index
    %34 = vector.load %arg3[%c0_8, %c0_9] : memref<8x128xf32, #tpu.memory_space<vmem>>, vector<8x128xf32>
    tpu.vector_store %arg3[%c0_8, %c0_9], %33 {strides = array<i32>} : memref<8x128xf32, #tpu.memory_space<vmem>>, vector<8x128xf32>,
    return
  }
  func.func @transform_0(%arg0: i32) -> (i32, i32) {
    %c0_i32 = arith.constant 0 : i32
    %c0_i32_0 = arith.constant 0 : i32
    return %arg0, %c0_i32 : i32, i32
  }
  func.func @transform_1(%arg0: i32) -> (i32, i32, i32) {
    %c0_i32 = arith.constant 0 : i32
    %c0_i32_0 = arith.constant 0 : i32
    %c0_i32_1 = arith.constant 0 : i32
    return %arg0, %c0_i32, %c0_i32_0 : i32, i32, i32
  }
  func.func @transform_2(%arg0: i32) -> (i32, i32) {
    %c0_i32 = arith.constant 0 : i32
    %c0_i32_0 = arith.constant 0 : i32
    return %arg0, %c0_i32 : i32, i32
  }
}

</mosaic_0001>

<llo_original>
// kernel: tpu_custom_call.1
$region0: #{tpu_custom_call.1}
  #allocation0 [shape = 'u32[]', space=smem, size = 0x4, offset = 0x4, fixed_abs, tag = 'smem constant byte address 0x4 - core index']
  #allocation1 [shape = 'u32[72,128]{1,0:T(1,128)}', space=vmem, size = 0x9000, scoped, tag = 'internal scratch']
  %s0 = inlined_call_operand.vmem [shape: f32[32,5], index: 0, kind: input, shape index: {}]
  %s1 = inlined_call_operand.vmem [shape: s32[2,1,16], index: 1, kind: input, shape index: {}]
  %s2 = inlined_call_operand.hbm [shape: f32[16,128], index: 2, kind: output, shape index: {}]
  %s3 = sld [smem:[#allocation0]]
  $region41: #{tpu_custom_call.1} parent=0
    _
  %s5 = ssub.s32 1, %s3
  %s6 = scalar_select 0, %s5, %s3
  $region1: #{tpu_custom_call.1} parent=0
    #allocation2 [shape = 'u8[8192]{0}', space=vmem, size = 0x2000, scoped, tag = 'output window, operand 0']
    #allocation3 [shape = 's32[2]{0}', space=sflag, size = 0x8, scoped, tag = 'scoped memory for tpu_custom_call.1']
    %7 = vsyncpa [#allocation3], 0
    %s8 = scalar_lea.sflag [#allocation3], 1
    %9 = vsyncpa %s8, 0
    loop: start=0, step=1, limit=4
    $region2: #{tpu_custom_call.1} parent=1 // loop_pre_header
      _
    $region3: #{tpu_custom_call.1} parent=1 // loop_header
      %s11 = sphi 0, %s15
      %p12 = scmp.ge.s32.totalorder %s11, 4
      %s21 = sphi 0, %s23
      %s24 = sphi 0, %s21
      %s25 = sphi 0, %s24
      %s41 = sphi 0, %s25
      %s47 = sphi 0, %s49
      %s50 = sphi 0, %s47
      %s51 = sphi 0, %s50
      %s67 = sphi 0, %s51
      %s73 = sphi 0, %s75
      %s76 = sphi 0, %s73
      %s77 = sphi 0, %s76
      %s93 = sphi 0, %s77
    $region4: #{tpu_custom_call.1} parent=1 // loop_header_branch
      %14 = sbr.rel (%p12) target = $region8
    $region5: #{tpu_custom_call.1} parent=1 // loop_body
      %s16 = ssub.s32 %s11, 1
      %s17 = ssub.s32 %s11, 2
      %s18 = sadd.s32 %s11, 1
      %s19 = ssub.s32 %s11, %s18
      %p20 = scmp.eq.s32.totalorder %s19, 0
      %s22 = sadd.s32 %s21, 1
      %s23 = scalar_select %p20, %s21, %s22
      %p26 = pneg %p20
      %p27 = scmp.eq.s32.totalorder %s11, 1
      %p28 = por %p26, %p27
      %p29 = scmp.ne.s32.totalorder %s21, %s24
      %p30 = scmp.eq.s32.totalorder %s11, 0
      %p31 = por %p29, %p30
      %p32 = scmp.ne.s32.totalorder %s21, %s24
      %p33 = scmp.eq.s32.totalorder %s16, 1
      %p34 = por %p32, %p33
      %p35 = scmp.ne.s32.totalorder %s24, %s25
      %p36 = scmp.eq.s32.totalorder %s16, 0
      %p37 = por %p35, %p36
      %p38 = scmp.ne.s32.totalorder %s24, %s25
      %p39 = scmp.eq.s32.totalorder %s17, 1
      %p40 = por %p38, %p39
      %p42 = scmp.ne.s32.totalorder %s25, %s41
      %p43 = scmp.eq.s32.totalorder %s17, 0
      %p44 = por %p42, %p43
      %s45 = ssub.s32 %s11, %s18
      %p46 = scmp.eq.s32.totalorder %s45, 0
      %s48 = sadd.s32 %s47, 1
      %s49 = scalar_select %p46, %s47, %s48
      %p52 = pneg %p46
      %p53 = scmp.eq.s32.totalorder %s11, 1
      %p54 = por %p52, %p53
      %p55 = scmp.ne.s32.totalorder %s47, %s50
      %p56 = scmp.eq.s32.totalorder %s11, 0
      %p57 = por %p55, %p56
      %p58 = scmp.ne.s32.totalorder %s47, %s50
      %p59 = scmp.eq.s32.totalorder %s16, 1
      %p60 = por %p58, %p59
      %p61 = scmp.ne.s32.totalorder %s50, %s51
      %p62 = scmp.eq.s32.totalorder %s16, 0
      %p63 = por %p61, %p62
      %p64 = scmp.ne.s32.totalorder %s50, %s51
      %p65 = scmp.eq.s32.totalorder %s17, 1
      %p66 = por %p64, %p65
      %p68 = scmp.ne.s32.totalorder %s51, %s67
      %p69 = scmp.eq.s32.totalorder %s17, 0
      %p70 = por %p68, %p69
      %s71 = ssub.s32 %s11, %s18
      %p72 = scmp.eq.s32.totalorder %s71, 0
      %s74 = sadd.s32 %s73, 1
      %s75 = scalar_select %p72, %s73, %s74
      %p78 = pneg %p72
      %p79 = scmp.eq.s32.totalorder %s11, 1
      %p80 = por %p78, %p79
      %p81 = scmp.ne.s32.totalorder %s73, %s76
      %p82 = scmp.eq.s32.totalorder %s11, 0
      %p83 = por %p81, %p82
      %p84 = scmp.ne.s32.totalorder %s73, %s76
      %p85 = scmp.eq.s32.totalorder %s16, 1
      %p86 = por %p84, %p85
      %p87 = scmp.ne.s32.totalorder %s76, %s77
      %p88 = scmp.eq.s32.totalorder %s16, 0
      %p89 = por %p87, %p88
      %p90 = scmp.ne.s32.totalorder %s76, %s77
      %p91 = scmp.eq.s32.totalorder %s17, 1
      %p92 = por %p90, %p91
      %p94 = scmp.ne.s32.totalorder %s77, %s93
      %p95 = scmp.eq.s32.totalorder %s17, 0
      %p96 = por %p94, %p95
      %p97 = scmp.le.s32.totalorder 1, %s11
      %p98 = scmp.lt.s32.totalorder %s11, 3
      %p99 = pnand %p97, %p98
      %p100 = pneg %p99
      // Predicated region
      $region9: #{tpu_custom_call.1} parent=5 // pred_check
        _
      $region10: #{tpu_custom_call.1} parent=5 // pred_check_branch
        %102 = sbr.rel (%p99) target = $region12
      $region11: #{tpu_custom_call.1} parent=5 // pred_region
        %s103 = ssub.s32 %s11, 1
      $region12: #{tpu_custom_call.1} parent=5 // pred_fallthru
        _
      %p104 = scmp.lt.s32.totalorder %s11, 2
      // Predicated region
      $region13: #{tpu_custom_call.1} parent=5 // pred_check
        %p105 = pneg %p104
      $region14: #{tpu_custom_call.1} parent=5 // pred_check_branch
        %107 = sbr.rel (%p105) target = $region16
      $region15: #{tpu_custom_call.1} parent=5 // pred_region
        // Predicated region
        $region17: #{tpu_custom_call.1} parent=15 // pred_check
          %p108 = pneg %p31
        $region18: #{tpu_custom_call.1} parent=15 // pred_check_branch
          %110 = sbr.rel (%p108) target = $region20
        $region19: #{tpu_custom_call.1} parent=15 // pred_region
          %s111 = smul.u32 2, %s11
          %p112 = scmp.lt.s32.totalorder %s111, 3
          %s113 = scalar_select %p112, %s111, 3
          %s114 = smul.addr %s113, 8
          %s115 = scalar_lea.vmem %s0, %s114
          %s116 = smul.u32 2, %s11
        $region20: #{tpu_custom_call.1} parent=15 // pred_fallthru
          _
        // Predicated region
        $region21: #{tpu_custom_call.1} parent=15 // pred_check
          %p117 = pneg %p57
        $region22: #{tpu_custom_call.1} parent=15 // pred_check_branch
          %119 = sbr.rel (%p117) target = $region24
        $region23: #{tpu_custom_call.1} parent=15 // pred_region
          %p120 = scmp.lt.s32.totalorder %s11, 1
          %s121 = scalar_select %p120, %s11, 1
          %s122 = scalar_lea.vmem %s1, %s121
        $region24: #{tpu_custom_call.1} parent=15 // pred_fallthru
          _
      $region16: #{tpu_custom_call.1} parent=5 // pred_fallthru
        _
      %p123 = scmp.le.s32.totalorder 1, %s11
      %p124 = scmp.lt.s32.totalorder %s11, 3
      %p125 = pnand %p123, %p124
      %p126 = pneg %p125
      // Predicated region
      $region25: #{tpu_custom_call.1} parent=5 // pred_check
        _
      $region26: #{tpu_custom_call.1} parent=5 // pred_check_branch
        %128 = sbr.rel (%p125) target = $region28
      $region27: #{tpu_custom_call.1} parent=5 // pred_region
        %s129 = ssub.s32 %s11, 1
        %s130 = smul.u32 2, %s16
        %p131 = scmp.lt.s32.totalorder %s130, 3
        %s132 = scalar_select %p131, %s130, 3
        %s133 = smul.addr %s132, 8
        %s134 = scalar_lea.vmem %s0, %s133
        %p135 = pneg %p37
        %p136 = pneg %p34
        %p137 = scmp.lt.s32.totalorder %s16, 1
        %s138 = scalar_select %p137, %s16, 1
        %s139 = scalar_lea.vmem %s1, %s138
        %p140 = pneg %p63
        %p141 = pneg %p60
        %p142 = pneg %p89
        %p143 = pneg %p86
        %s144 = sand.u32 %s76, 1
        %s145 = scalar_lea.sflag [#allocation3], %s144
        %s146 = sand.u32 %s76, 1
        %s147 = smul.addr %s146, 8
        %s148 = scalar_lea.vmem [#allocation2], %s147
        %s149 = smul.u32 2, %s16
        %p150 = scmp.lt.s32.totalorder %s149, 3
        %s151 = scalar_select %p150, %s149, 3
        %s152 = smul.addr %s151, 8
        %s153 = scalar_lea.vmem %s0, %s152
        %s154 = smul.u32 2, %s16
        %p155 = scmp.lt.s32.totalorder %s16, 1
        %s156 = scalar_select %p155, %s16, 1
        %s157 = scalar_lea.vmem %s1, %s156
        %v158 = vld [vmem:[%s153] sm:$0xff]
        %v159 = vld [vmem:[%s153 + $0x8] sm:$0xff]
        %v160 = vld [vmem:[%s157] sm:$0x1]
        %vm161 = vcmask 39936
        %v162 = vsel %vm161, %v158, -inf
        %163 = vmax.xlane.f32.xlu0 %v162
        %v164 = vpop.xlane.xlu0 %163
        %v165 = vsel %vm161, %v159, -inf
        %166 = vmax.xlane.f32.xlu0 %v165
        %v167 = vpop.xlane.xlu0 %166
        %v168 = vsub.f32 %v158, %v164
        %v169 = vsub.f32 %v159, %v167
        %v170 = vmul.f32 %v168, 1.442695
        %v171 = vpow.pop %v170
        %v172 = vmul.f32 %v169, 1.442695
        %v173 = vpow.pop %v172
        %v174 = vsel %vm161, %v171, 0.0
        %175 = vadd.xlane.f32.xlu0 %v174
        %v176 = vpop.xlane.xlu0 %175
        %v177 = vsel %vm161, %v173, 0.0
        %178 = vadd.xlane.f32.xlu0 %v177
        %v179 = vpop.xlane.xlu0 %178
        %v180 = vlog2.pop %v176
        %v181 = vmul.f32 %v180, 0.6931472
        %v182 = vlog2.pop %v179
        %v183 = vmul.f32 %v182, 0.6931472
        %v184 = vadd.f32 %v181, %v164
        %v185 = vadd.f32 %v183, %v167
        %v186 = vsub.f32 %v184, %v158
        %v187 = vsub.f32 %v185, %v159
        %vm188 = vcmp.eq.s32.totalorder %v160, 4294967196
        %v189 = vsel %vm188, 4294967295, %v160
        %v190 = vlaneseq
        %v191 = vshrl.u32 %v190, 7
        %v192 = vperm.slane %v189, 0
        %vm193 = vcmp.eq.s32.totalorder %v191, %v192
        %v194 = vsel %vm193, 1, 0
        %v195 = vcvt.s32.f32 %v194
        %vm196 = vcmask 130048
        %v198 = vsel %vm196, %v195, 0
        %200 = vmatpush.msra.mxu0 0.0
        %201 = vmatpush.msra.mxu0 0.0
        %202 = vmatpush.msra.mxu0 0.0
        %203 = vmatpush.msra.mxu0 0.0
        %204 = vmatpush.msra.mxu0 0.0
        %205 = vmatpush.msra.mxu0 0.0
        %206 = vmatpush.msra.mxu0 0.0
        %207 = vmatpush.msra.mxu0 0.0
        %208 = vmatpush.msra.mxu0 0.0
        %209 = vmatpush.msra.mxu0 0.0
        %210 = vmatpush.msra.mxu0 0.0
        %211 = vmatpush.msra.mxu0 0.0
        %212 = vmatpush.msra.mxu0 0.0
        %213 = vmatpush.msra.mxu0 0.0
        %214 = vmatpush.msra.mxu0 %v187
        %215 = vmatpush.msra.mxu0 %v186
        %216 = vmatmul.f32.gmra.mxu0 %v198
        %v217 = vpop.f32.mrf.mxu0
        %v218 = vadd.f32 0.0, %v217
        %219 = vdwg.mxu0
        %v220 = vlaneseq
        %v221 = vand.u32 %v220, 127
        %vm222 = vcmp.eq.s32.totalorder %v191, %v221
        %v223 = vsel %vm222, %v218, 0.0
        %v224 = vsel %vm161, %v223, 0.0
        %225 = vadd.xlane.f32.xlu0 %v224
        %v226 = vpop.xlane.xlu0 %225
        %v227 = vrot.slane %v226, 4
        %v228 = vadd.f32 %v226, %v227
        %v229 = vrot.slane %v228, 2
        %v230 = vadd.f32 %v228, %v229
        %v231 = vrot.slane %v230, 1
        %v232 = vadd.f32 %v230, %v231
        %s233 = vtos %v232
        %v234 = vstv %s233
        %235 = vst [vmem:[%s148] sm:$0xff] %v234
        %s236 = sand.u32 %s76, 1
        %s237 = scalar_lea.sflag [#allocation3], %s236
        %s238 = sand.u32 %s76, 1
        %s239 = smul.addr %s238, 8
        %s240 = scalar_lea.vmem [#allocation2], %s239
        // Predicated region
        $region29: #{tpu_custom_call.1} parent=27 // pred_check
          %p241 = pneg %p86
        $region30: #{tpu_custom_call.1} parent=27 // pred_check_branch
          %243 = sbr.rel (%p241) target = $region32
        $region31: #{tpu_custom_call.1} parent=27 // pred_region
          %245 = vsyncadd %s237, 0
          %s246 = smul.addr %s16, 8
          %s247 = scalar_lea.hbm %s2, %s246
          %s249 = sshll.u32 %s240, 4
          %s250 = int_to_ptr.vmem [resolvable:$true] %s249
          %s251 = sshll.u32 %s247, 4
          %s252 = int_to_ptr.hbm [resolvable:$true] %s251
          %254 = dma.vmem_to_hbm [thread:$0]  %s250, 128, %s252, %s237
        $region32: #{tpu_custom_call.1} parent=27 // pred_fallthru
          _
      $region28: #{tpu_custom_call.1} parent=5 // pred_fallthru
        _
      %p255 = scmp.le.s32.totalorder 2, %s11
      // Predicated region
      $region33: #{tpu_custom_call.1} parent=5 // pred_check
        %p256 = pneg %p255
      $region34: #{tpu_custom_call.1} parent=5 // pred_check_branch
        %258 = sbr.rel (%p256) target = $region36
      $region35: #{tpu_custom_call.1} parent=5 // pred_region
        %s259 = ssub.s32 %s11, 2
        // Predicated region
        $region37: #{tpu_custom_call.1} parent=35 // pred_check
          %p260 = pneg %p92
        $region38: #{tpu_custom_call.1} parent=35 // pred_check_branch
          %262 = sbr.rel (%p260) target = $region40
        $region39: #{tpu_custom_call.1} parent=35 // pred_region
          %s263 = sand.u32 %s77, 1
          %s264 = scalar_lea.sflag [#allocation3], %s263
          %s265 = sand.u32 %s77, 1
          %s266 = smul.addr %s265, 8
          %s267 = scalar_lea.vmem [#allocation2], %s266
          %269 = dma.done %s264, 128
        $region40: #{tpu_custom_call.1} parent=35 // pred_fallthru
          _
      $region36: #{tpu_custom_call.1} parent=5 // pred_fallthru
        _
    $region6: #{tpu_custom_call.1} parent=1 // loop_footer
      %s15 = sadd.s32 1, %s11
    $region7: #{tpu_custom_call.1} parent=1 // loop_footer_branch
      %10 = sbr.rel target = $region3
    $region8: #{tpu_custom_call.1} parent=1 // loop_exit
      _
    %270 = vsyncpa [#allocation3], 1
    %s271 = scalar_lea.sflag [#allocation3], 1
    %272 = vsyncpa %s271, 1

</llo_original>
